<compile_context>
chip_gen: v6e
topology: v6e:2x2x1
jax: 0.10.0
libtpu: 0.0.40
codegen_flags: <defaults>
</compile_context>

<pallas_src>
import functools

import jax
import jax.numpy as jnp
from jax.experimental import pallas as pl
from jax.experimental.pallas import tpu as pltpu


# ---------------------------------------------------------------------------
# Small helpers
# ---------------------------------------------------------------------------
def _round_up(n, m):
    return ((n + m - 1) // m) * m


def _vmem_capacity_bytes():
    try:
        return int(pltpu.get_tpu_info().vmem_capacity_bytes)
    except Exception:
        return 64 * 1024 * 1024  # conservative default: v7x per-core VMEM


def _sublane_align(dtype):
    # Sub-32-bit dtypes pack along sublanes: 8 rows for 4B, 16 for 2B, 32 for 1B.
    return {4: 8, 2: 16, 1: 32}.get(jnp.dtype(dtype).itemsize, 8)


def _pick_tile(extent, align, cap):
    """Largest multiple of `align` that divides `extent` and is <= cap.
    `extent` must already be padded to a multiple of `align`."""
    cap = max(align, (int(cap) // align) * align)
    best = align
    t = align
    limit = min(extent, cap)
    while t <= limit:
        if extent % t == 0:
            best = t
        t += align
    return best


def _channel_gate(mean_bc, w, pad):
    """PyTorch Conv1d(1,1,K,padding=pad,bias=False) along channels + sigmoid.
    mean_bc: (B, C) f32, w: (K,) f32.  Conv1d is cross-correlation."""
    C = mean_bc.shape[1]
    K = w.shape[0]
    mp = jnp.pad(mean_bc, ((0, 0), (pad, pad)))
    y = jnp.zeros_like(mean_bc)
    for kk in range(K):  # static, tiny K
        y = y + w[kk] * mp[:, kk : kk + C]
    return jax.nn.sigmoid(y)


def _band_matrix(w, c_pad, c_real, pad):
    """band[j, c] = w[c - j + pad] for the 'same' zero-padded channel conv,
    zeroed outside the real channel range.  Shape (c_pad, c_pad), f32."""
    K = w.shape[0]
    j = jnp.arange(c_pad)[:, None]
    c = jnp.arange(c_pad)[None, :]
    k_idx = c - j + pad
    valid = (k_idx >= 0) & (k_idx < K) & (c < c_real) & (j < c_real)
    return jnp.where(valid, w[jnp.clip(k_idx, 0, K - 1)], 0.0).astype(jnp.float32)


# ---------------------------------------------------------------------------
# Kernels
# ---------------------------------------------------------------------------
def _sum_kernel(x_ref, sum_ref):
    """Pass 1: accumulate per-row spatial sums into a resident f32 block."""
    @pl.when(pl.program_id(1) == 0)
    def _():
        sum_ref[...] = jnp.zeros_like(sum_ref)

    sum_ref[...] += jnp.sum(
        x_ref[...].astype(jnp.float32), axis=-1, keepdims=True
    )


def _scale_kernel(gate_ref, x_ref, o_ref):
    """Pass 2: scale by the (bc_tile, 1) gate broadcast over the lane axis.
    Multiply in x.dtype: native bf16 on v6e/v7x, auto-converted on v5e."""
    o_ref[...] = x_ref[...] * gate_ref[...]


def _fused_kernel(x_ref, band_ref, o_ref, *, inv_s):
    """Single pass with x resident: mean -> channel conv -> sigmoid -> scale."""
    mean = jnp.sum(x_ref[...].astype(jnp.float32), axis=-1) * inv_s      # (B, Cp)
    # Channel conv as a banded-matrix contraction along the lane axis.
    logits = jnp.sum(mean[:, None, :] * band_ref[...][None, :, :], axis=-1)
    gate = 1.0 / (1.0 + jnp.exp(-logits))                                 # (B, Cp)
    gate = gate.astype(o_ref.dtype)
    o_ref[...] = x_ref[...] * gate[:, :, None]


# ---------------------------------------------------------------------------
# Wrapper
# ---------------------------------------------------------------------------
def eca_layer_3d(x, conv_weight, *, use_fused=None):
    """x: (B, C, D, H, W); conv_weight: (1, 1, K) as in nn.Conv1d."""
    B, C, D, H, W = x.shape
    K = conv_weight.shape[-1]
    pad = (K - 1) // 2
    S = D * H * W
    BC = B * C
    w = conv_weight.reshape(K).astype(jnp.float32)

    itemsize = jnp.dtype(x.dtype).itemsize
    sub = _sublane_align(x.dtype)

    # Generation-aware VMEM budget: half of physical capacity as the scoped
    # limit (64 MiB on v5e/v6e, 32 MiB on v7x) minus headroom for compiler
    # internal scratch and the tiny gate / sum blocks.
    vmem_limit = _vmem_capacity_bytes() // 2
    budget = vmem_limit - 4 * 1024 * 1024

    Sp = _round_up(S, 128)
    Cp = _round_up(C, sub)
    BCp = _round_up(BC, sub)

    # ---------------- fused single-pass path (small activations) -----------
    elems_p = B * Cp * Sp
    fused_live = (
        2 * 2 * elems_p * itemsize      # in + out blocks, double-buffered
        + elems_p * 4                   # f32 working copy for the reduction
        + B * Cp * Cp * 4               # conv intermediate
        + Cp * Cp * 4                   # band matrix
    )
    if use_fused is None:
        use_fused = fused_live <= min(budget, 24 * 1024 * 1024)

    if use_fused:
        x3 = x.reshape(B, C, S)
        if (Cp != C) or (Sp != S):
            x3 = jnp.pad(x3, ((0, 0), (0, Cp - C), (0, Sp - S)))
        band = _band_matrix(w, Cp, C, pad)

        out3 = pl.pallas_call(
            functools.partial(_fused_kernel, inv_s=1.0 / S),
            out_shape=jax.ShapeDtypeStruct((B, Cp, Sp), x.dtype),
            grid=(1,),
            in_specs=[
                pl.BlockSpec((B, Cp, Sp), lambda i: (0, 0, 0)),
                pl.BlockSpec((Cp, Cp), lambda i: (0, 0)),
            ],
            out_specs=pl.BlockSpec((B, Cp, Sp), lambda i: (0, 0, 0)),
            compiler_params=pltpu.CompilerParams(vmem_limit_bytes=vmem_limit),
            cost_estimate=pl.CostEstimate(
                flops=int(3 * elems_p + 2 * B * Cp * Cp),
                transcendentals=int(B * Cp),
                bytes_accessed=int(2 * elems_p * itemsize + Cp * Cp * 4),
            ),
        )(x3, band)

        if (Cp != C) or (Sp != S):
            out3 = out3[:, :C, :S]
        return out3.reshape(B, C, D, H, W)

    # ---------------- streaming two-pass path -------------------------------
    x2 = x.reshape(BC, S)
    if (BCp != BC) or (Sp != S):
        x2 = jnp.pad(x2, ((0, BCp - BC), (0, Sp - S)))

    # Sublane tile: keep >= 2 grid rows when possible so both v7x TensorCores
    # get work on pass 1's only 'parallel' axis.
    bc_cap = 256
    if BCp >= 2 * sub:
        bc_cap = min(bc_cap, max(sub, (BCp // 2) // sub * sub))
    bc_tile = _pick_tile(BCp, sub, bc_cap)

    # Lane tiles picked per pass: pass 1 only double-buffers x; pass 2 must
    # fit x + out double-buffered.  Target ~4-8 MiB blocks (HBM roofline
    # sweet spot), bounded by the VMEM budget.
    def lane_cap(n_streams, target_bytes):
        by_budget = budget // (2 * n_streams * bc_tile * itemsize)
        by_target = target_bytes // (bc_tile * itemsize)
        return max(128, min(by_budget, by_target))

    s_tile1 = _pick_tile(Sp, 128, lane_cap(1, 8 * 1024 * 1024))
    s_tile2 = _pick_tile(Sp, 128, lane_cap(2, 4 * 1024 * 1024))

    # ---- pass 1: per-(b,c) spatial sums (resident f32 accumulator) --------
    sums = pl.pallas_call(
        _sum_kernel,
        out_shape=jax.ShapeDtypeStruct((BCp, 1), jnp.float32),
        grid=(BCp // bc_tile, Sp // s_tile1),
        in_specs=[pl.BlockSpec((bc_tile, s_tile1), lambda i, j: (i, j))],
        out_specs=pl.BlockSpec((bc_tile, 1), lambda i, j: (i, 0)),
        compiler_params=pltpu.CompilerParams(
            dimension_semantics=("parallel", "arbitrary"),
            vmem_limit_bytes=vmem_limit,
        ),
        cost_estimate=pl.CostEstimate(
            flops=int(BCp * Sp),
            transcendentals=0,
            bytes_accessed=int(BCp * Sp * itemsize + BCp * 4),
        ),
    )(x2)

    # ---- gate: mean -> channel conv -> sigmoid (tiny, plain JAX) ----------
    # Padded lanes are zero so the sums are exact; divide by the real S.
    mean_bc = (sums[:BC, 0] / jnp.float32(S)).reshape(B, C)
    gate = _channel_gate(mean_bc, w, pad)                    # (B, C) f32
    gate2 = gate.reshape(BC, 1).astype(x.dtype)              # bf16 fast path
    if BCp != BC:
        gate2 = jnp.pad(gate2, ((0, BCp - BC), (0, 0)))

    # ---- pass 2: stream x again and scale by the broadcast gate -----------
    out2 = pl.pallas_call(
        _scale_kernel,
        out_shape=jax.ShapeDtypeStruct((BCp, Sp), x.dtype),
        grid=(BCp // bc_tile, Sp // s_tile2),
        in_specs=[
            pl.BlockSpec((bc_tile, 1), lambda i, j: (i, 0)),         # gate
            pl.BlockSpec((bc_tile, s_tile2), lambda i, j: (i, j)),   # x
        ],
        out_specs=pl.BlockSpec((bc_tile, s_tile2), lambda i, j: (i, j)),
        compiler_params=pltpu.CompilerParams(
            dimension_semantics=("parallel", "parallel"),
            vmem_limit_bytes=vmem_limit,
        ),
        cost_estimate=pl.CostEstimate(
            flops=int(BCp * Sp),
            transcendentals=0,
            bytes_accessed=int(2 * BCp * Sp * itemsize + BCp * itemsize),
        ),
    )(gate2, x2)

    if (BCp != BC) or (Sp != S):
        out2 = out2[:BC, :S]
    return out2.reshape(B, C, D, H, W)


# ---------------------------------------------------------------------------
# Pure-JAX reference (matches the PyTorch forward)
# ---------------------------------------------------------------------------
def _eca_reference(x, conv_weight):
    B, C, D, H, W = x.shape
    K = conv_weight.shape[-1]
    pad = (K - 1) // 2
    m = x.astype(jnp.float32).mean(axis=(2, 3, 4))               # (B, C)
    mp = jnp.pad(m, ((0, 0), (pad, pad)))
    y = sum(conv_weight[0, 0, kk] * mp[:, kk : kk + C] for kk in range(K))
    g = jax.nn.sigmoid(y)
    return x * g[:, :, None, None, None].astype(x.dtype)


if __name__ == "__main__":
    key = jax.random.PRNGKey(0)
    kx, kw, kx2 = jax.random.split(key, 3)

    K = 5
    conv_weight = jax.random.normal(kw, (1, 1, K), dtype=jnp.float32) * 0.3

    # 1) Small, aligned shape -> fused single-pass path.
    B, C, D, H, W = 2, 8, 4, 8, 8
    x = jax.random.normal(kx, (B, C, D, H, W), dtype=jnp.float32)
    out = jax.block_until_ready(eca_layer_3d(x, conv_weight))
    ref = _eca_reference(x, conv_weight)
    assert out.shape == x.shape
    assert jnp.allclose(out, ref, atol=1e-5, rtol=1e-5), "fused path mismatch"

    # 2) Small, unaligned shape, streaming path forced -> exercises the padded
    #    two-pass pipeline (reduction + scale) and the gate in plain JAX.
    B2, C2, D2, H2, W2 = 2, 6, 3, 7, 5
    x2 = jax.random.normal(kx2, (B2, C2, D2, H2, W2), dtype=jnp.float32)
    out2 = jax.block_until_ready(eca_layer_3d(x2, conv_weight, use_fused=False))
    ref2 = _eca_reference(x2, conv_weight)
    assert out2.shape == x2.shape
    assert jnp.allclose(out2, ref2, atol=1e-5, rtol=1e-5), "streaming path mismatch"

    print("KERNEL_OK")
</pallas_src>

<mosaic_0001>
module attributes {stable_mosaic.version = 11 : i64} {
  func.func @_fused_kernel(%arg0: i32, %arg1: memref<2x8x256xf32, #tpu.memory_space<vmem>>, %arg2: memref<8x8xf32, #tpu.memory_space<vmem>>, %arg3: memref<2x8x256xf32, #tpu.memory_space<vmem>>) attributes {dimension_semantics = [#tpu.dimension_semantics<arbitrary>], iteration_bounds = array<i64: 1>, scalar_prefetch = 0 : i64, scratch_operands = 0 : i64, tpu.core_type = #tpu.core_type<tc>, window_params = [{pipeline_mode = #tpu.pipeline_mode<synchronous>, transform_indices = @transform_0, window_bounds = array<i64: 2, 8, 256>}, {pipeline_mode = #tpu.pipeline_mode<synchronous>, transform_indices = @transform_1, window_bounds = array<i64: 8, 8>}, {pipeline_mode = #tpu.pipeline_mode<synchronous>, transform_indices = @transform_2, window_bounds = array<i64: 2, 8, 256>}]} {
    %c0 = arith.constant 0 : index
    %c0_0 = arith.constant 0 : index
    %c0_1 = arith.constant 0 : index
    %0 = vector.load %arg1[%c0, %c0_0, %c0_1] : memref<2x8x256xf32, #tpu.memory_space<vmem>>, vector<2x8x256xf32>
    %cst = arith.constant dense<0.000000e+00> : vector<2x8xf32>
    %1 = vector.multi_reduction <add>, %0, %cst [2] : vector<2x8x256xf32> to vector<2x8xf32>
    %cst_2 = arith.constant 3.906250e-03 : f32
    %2 = vector.broadcast %cst_2 : f32 to vector<2x8xf32>
    %3 = arith.mulf %1, %2 : vector<2x8xf32>
    %4 = vector.shape_cast %3 : vector<2x8xf32> to vector<2x1x8xf32>
    %c0_3 = arith.constant 0 : index
    %c0_4 = arith.constant 0 : index
    %5 = vector.load %arg2[%c0_3, %c0_4] : memref<8x8xf32, #tpu.memory_space<vmem>>, vector<8x8xf32>
    %6 = vector.shape_cast %5 : vector<8x8xf32> to vector<1x8x8xf32>
    %7 = vector.broadcast %4 : vector<2x1x8xf32> to vector<2x8x8xf32>
    %8 = vector.broadcast %6 : vector<1x8x8xf32> to vector<2x8x8xf32>
    %9 = arith.mulf %7, %8 : vector<2x8x8xf32>
    %cst_5 = arith.constant dense<0.000000e+00> : vector<2x8xf32>
    %10 = vector.multi_reduction <add>, %9, %cst_5 [2] : vector<2x8x8xf32> to vector<2x8xf32>
    %cst_6 = arith.constant 0.000000e+00 : f32
    %11 = vector.broadcast %cst_6 : f32 to vector<2x8xf32>
    %12 = arith.subf %11, %10 : vector<2x8xf32>
    %13 = math.exp %12 : vector<2x8xf32>
    %cst_7 = arith.constant 1.000000e+00 : f32
    %14 = vector.broadcast %cst_7 : f32 to vector<2x8xf32>
    %15 = arith.addf %14, %13 : vector<2x8xf32>
    %cst_8 = arith.constant 1.000000e+00 : f32
    %16 = vector.broadcast %cst_8 : f32 to vector<2x8xf32>
    %17 = arith.divf %16, %15 : vector<2x8xf32>
    %c0_9 = arith.constant 0 : index
    %c0_10 = arith.constant 0 : index
    %c0_11 = arith.constant 0 : index
    %18 = vector.load %arg1[%c0_9, %c0_10, %c0_11] : memref<2x8x256xf32, #tpu.memory_space<vmem>>, vector<2x8x256xf32>
    %19 = vector.shape_cast %17 : vector<2x8xf32> to vector<2x8x1xf32>
    %20 = vector.broadcast %19 : vector<2x8x1xf32> to vector<2x8x256xf32>
    %21 = arith.mulf %18, %20 : vector<2x8x256xf32>
    %c0_12 = arith.constant 0 : index
    %c0_13 = arith.constant 0 : index
    %c0_14 = arith.constant 0 : index
    %22 = vector.load %arg3[%c0_12, %c0_13, %c0_14] : memref<2x8x256xf32, #tpu.memory_space<vmem>>, vector<2x8x256xf32>
    tpu.vector_store %arg3[%c0_12, %c0_13, %c0_14], %21 {strides = array<i32>} : memref<2x8x256xf32, #tpu.memory_space<vmem>>, vector<2x8x256xf32>,
    return
  }
  func.func @transform_0(%arg0: i32) -> (i32, i32, i32) {
    %c0_i32 = arith.constant 0 : i32
    %c0_i32_0 = arith.constant 0 : i32
    %c0_i32_1 = arith.constant 0 : i32
    %c0_i32_2 = arith.constant 0 : i32
    return %c0_i32, %c0_i32_0, %c0_i32_1 : i32, i32, i32
  }
  func.func @transform_1(%arg0: i32) -> (i32, i32) {
    %c0_i32 = arith.constant 0 : i32
    %c0_i32_0 = arith.constant 0 : i32
    %c0_i32_1 = arith.constant 0 : i32
    return %c0_i32, %c0_i32_0 : i32, i32
  }
  func.func @transform_2(%arg0: i32) -> (i32, i32, i32) {
    %c0_i32 = arith.constant 0 : i32
    %c0_i32_0 = arith.constant 0 : i32
    %c0_i32_1 = arith.constant 0 : i32
    %c0_i32_2 = arith.constant 0 : i32
    return %c0_i32, %c0_i32_0, %c0_i32_1 : i32, i32, i32
  }
}

</mosaic_0001>

<llo_original>
// kernel: tpu_custom_call.1
$region0: #{tpu_custom_call.1}
  #allocation0 [shape = 'u32[]', space=smem, size = 0x4, offset = 0x4, fixed_abs, tag = 'smem constant byte address 0x4 - core index']
  #allocation1 [shape = 'u32[144,128]{1,0:T(1,128)}', space=vmem, size = 0x12000, scoped, tag = 'internal scratch']
  %s0 = inlined_call_operand.hbm [shape: f32[2,8,256], index: 0, kind: input, shape index: {}]
  %s1 = inlined_call_operand.hbm [shape: f32[8,8], index: 1, kind: input, shape index: {}]
  %s2 = inlined_call_operand.hbm [shape: f32[2,8,256], index: 2, kind: output, shape index: {}]
  %s3 = sld [smem:[#allocation0]]
  $region26: #{tpu_custom_call.1} parent=0
    _
  %s5 = ssub.s32 1, %s3
  %s6 = scalar_select 0, %s5, %s3
  $region1: #{tpu_custom_call.1} parent=0
    #allocation2 [shape = 'u8[16384]{0}', space=vmem, size = 0x4000, scoped, tag = 'input window, operand 0, single buffered']
    #allocation3 [shape = 's32[1]{0}', space=sflag, size = 0x4, scoped, tag = 'scoped memory for tpu_custom_call.1']
    #allocation4 [shape = 's32[1]{0}', space=sflag, size = 0x4, scoped, tag = 'scoped memory for tpu_custom_call.1']
    #allocation5 [shape = 'u8[4096]{0}', space=vmem, size = 0x1000, scoped, tag = 'input window, operand 1, single buffered']
    #allocation6 [shape = 's32[1]{0}', space=sflag, size = 0x4, scoped, tag = 'scoped memory for tpu_custom_call.1']
    #allocation7 [shape = 'u8[16384]{0}', space=vmem, size = 0x4000, scoped, tag = 'output window, operand 0, single buffered']
    %7 = vsyncpa [#allocation3], 0
    %8 = vsyncpa [#allocation6], 0
    %9 = vsyncpa [#allocation4], 0
    // Predicated region
    $region2: #{tpu_custom_call.1} parent=1 // pred_check
      _
    $region3: #{tpu_custom_call.1} parent=1 // pred_check_branch
      %11 = sbr.rel (0) target = $region5
    $region4: #{tpu_custom_call.1} parent=1 // pred_region
      %s13 = ssub.s32 512, 512
      %14 = vsyncadd [#allocation3], %s13
      %s15 = sshll.u32 [#allocation2], 4
      %s16 = int_to_ptr.vmem [resolvable:$true] %s15
      %21 = dma.hbm_to_vmem [thread:$0]  %s0, 512, %s16, [#allocation3], 256, 256, 16
    $region5: #{tpu_custom_call.1} parent=1 // pred_fallthru
      _
    // Predicated region
    $region6: #{tpu_custom_call.1} parent=1 // pred_check
      _
    $region7: #{tpu_custom_call.1} parent=1 // pred_check_branch
      %23 = sbr.rel (0) target = $region9
    $region8: #{tpu_custom_call.1} parent=1 // pred_region
      %s25 = ssub.s32 128, 128
      %26 = vsyncadd [#allocation6], %s25
      %s28 = sshll.u32 [#allocation5], 4
      %s29 = int_to_ptr.vmem [resolvable:$true] %s28
      %31 = dma.hbm_to_vmem [thread:$0]  %s1, 128, %s29, [#allocation6]
    $region9: #{tpu_custom_call.1} parent=1 // pred_fallthru
      _
    // Predicated region
    $region10: #{tpu_custom_call.1} parent=1 // pred_check
      _
    $region11: #{tpu_custom_call.1} parent=1 // pred_check_branch
      %33 = sbr.rel (0) target = $region13
    $region12: #{tpu_custom_call.1} parent=1 // pred_region
      %34 = dma.done [#allocation3], 512
    $region13: #{tpu_custom_call.1} parent=1 // pred_fallthru
      _
    // Predicated region
    $region14: #{tpu_custom_call.1} parent=1 // pred_check
      _
    $region15: #{tpu_custom_call.1} parent=1 // pred_check_branch
      %36 = sbr.rel (0) target = $region17
    $region16: #{tpu_custom_call.1} parent=1 // pred_region
      %37 = dma.done [#allocation6], 128
    $region17: #{tpu_custom_call.1} parent=1 // pred_fallthru
      _
    %v38 = vld [vmem:[#allocation2] sm:$0xff]
    %v39 = vld [vmem:[#allocation2 + $0x8] sm:$0xff]
    %v40 = vld [vmem:[#allocation2 + $0x10] sm:$0xff]
    %v41 = vld [vmem:[#allocation2 + $0x18] sm:$0xff]
    %v42 = vadd.f32 %v38, %v39
    %43 = vadd.xlane.f32.xlu0 %v42
    %v44 = vpop.xlane.xlu0 %43
    %v45 = vadd.f32 %v40, %v41
    %46 = vadd.xlane.f32.xlu0 %v45
    %v47 = vpop.xlane.xlu0 %46
    %v48 = vmul.f32 %v44, 0.00390625
    %v49 = vmul.f32 %v47, 0.00390625
    %v50 = vld [vmem:[#allocation5] sm:$0xff]
    %v52 = vlaneseq
    %v53 = vshrl.u32 %v52, 7
    %v54 = vsub.s32 0, %v53
    %v55 = vrot.slane %v50, %v54
    %57 = vbcast.lane.b32.xlu0 %v55, 256
    %v58 = vpop.permute.xlu0 %57
    %v59 = vlaneseq
    %v60 = vshrl.u32 %v59, 7
    %v61 = vsub.s32 1, %v60
    %v62 = vrot.slane %v50, %v61
    %64 = vbcast.lane.b32.xlu0 %v62, 256
    %v65 = vpop.permute.xlu0 %64
    %v66 = vlaneseq
    %v67 = vshrl.u32 %v66, 7
    %v68 = vsub.s32 2, %v67
    %v69 = vrot.slane %v50, %v68
    %71 = vbcast.lane.b32.xlu0 %v69, 256
    %v72 = vpop.permute.xlu0 %71
    %v73 = vlaneseq
    %v74 = vshrl.u32 %v73, 7
    %v75 = vsub.s32 3, %v74
    %v76 = vrot.slane %v50, %v75
    %78 = vbcast.lane.b32.xlu0 %v76, 256
    %v79 = vpop.permute.xlu0 %78
    %v80 = vlaneseq
    %v81 = vshrl.u32 %v80, 7
    %v82 = vsub.s32 4, %v81
    %v83 = vrot.slane %v50, %v82
    %85 = vbcast.lane.b32.xlu0 %v83, 256
    %v86 = vpop.permute.xlu0 %85
    %v87 = vlaneseq
    %v88 = vshrl.u32 %v87, 7
    %v89 = vsub.s32 5, %v88
    %v90 = vrot.slane %v50, %v89
    %92 = vbcast.lane.b32.xlu0 %v90, 256
    %v93 = vpop.permute.xlu0 %92
    %v94 = vlaneseq
    %v95 = vshrl.u32 %v94, 7
    %v96 = vsub.s32 6, %v95
    %v97 = vrot.slane %v50, %v96
    %99 = vbcast.lane.b32.xlu0 %v97, 256
    %v100 = vpop.permute.xlu0 %99
    %v101 = vlaneseq
    %v102 = vshrl.u32 %v101, 7
    %v103 = vsub.s32 7, %v102
    %v104 = vrot.slane %v50, %v103
    %106 = vbcast.lane.b32.xlu0 %v104, 256
    %v107 = vpop.permute.xlu0 %106
    %v116 = vmul.f32 %v48, %v58
    %v117 = vmul.f32 %v48, %v65
    %v118 = vmul.f32 %v48, %v72
    %v119 = vmul.f32 %v48, %v79
    %v120 = vmul.f32 %v48, %v86
    %v121 = vmul.f32 %v48, %v93
    %v122 = vmul.f32 %v48, %v100
    %v123 = vmul.f32 %v48, %v107
    %v124 = vmul.f32 %v49, %v58
    %v125 = vmul.f32 %v49, %v65
    %v126 = vmul.f32 %v49, %v72
    %v127 = vmul.f32 %v49, %v79
    %v128 = vmul.f32 %v49, %v86
    %v129 = vmul.f32 %v49, %v93
    %v130 = vmul.f32 %v49, %v100
    %v131 = vmul.f32 %v49, %v107
    %148 = vset.pattern.permute.xlu0 0
    %149 = vperm.xlu0 %148, %v116
    %v150 = vpop.permute.xlu0 %149
    %151 = vset.pattern.permute.xlu0 0
    %152 = vperm.xlu0 %151, %v117
    %v153 = vpop.permute.xlu0 %152
    %154 = vset.pattern.permute.xlu0 0
    %155 = vperm.xlu0 %154, %v118
    %v156 = vpop.permute.xlu0 %155
    %157 = vset.pattern.permute.xlu0 0
    %158 = vperm.xlu0 %157, %v119
    %v159 = vpop.permute.xlu0 %158
    %160 = vset.pattern.permute.xlu0 0
    %161 = vperm.xlu0 %160, %v120
    %v162 = vpop.permute.xlu0 %161
    %163 = vset.pattern.permute.xlu0 0
    %164 = vperm.xlu0 %163, %v121
    %v165 = vpop.permute.xlu0 %164
    %166 = vset.pattern.permute.xlu0 0
    %167 = vperm.xlu0 %166, %v122
    %v168 = vpop.permute.xlu0 %167
    %169 = vset.pattern.permute.xlu0 0
    %170 = vperm.xlu0 %169, %v123
    %v171 = vpop.permute.xlu0 %170
    %172 = vset.pattern.permute.xlu0 0
    %173 = vperm.xlu0 %172, %v124
    %v174 = vpop.permute.xlu0 %173
    %175 = vset.pattern.permute.xlu0 0
    %176 = vperm.xlu0 %175, %v125
    %v177 = vpop.permute.xlu0 %176
    %178 = vset.pattern.permute.xlu0 0
    %179 = vperm.xlu0 %178, %v126
    %v180 = vpop.permute.xlu0 %179
    %181 = vset.pattern.permute.xlu0 0
    %182 = vperm.xlu0 %181, %v127
    %v183 = vpop.permute.xlu0 %182
    %184 = vset.pattern.permute.xlu0 0
    %185 = vperm.xlu0 %184, %v128
    %v186 = vpop.permute.xlu0 %185
    %187 = vset.pattern.permute.xlu0 0
    %188 = vperm.xlu0 %187, %v129
    %v189 = vpop.permute.xlu0 %188
    %190 = vset.pattern.permute.xlu0 0
    %191 = vperm.xlu0 %190, %v130
    %v192 = vpop.permute.xlu0 %191
    %193 = vset.pattern.permute.xlu0 0
    %194 = vperm.xlu0 %193, %v131
    %v195 = vpop.permute.xlu0 %194
    %v196 = vlaneseq
    %v197 = vand.u32 %v196, 127
    %v198 = vlaneseq
    %v199 = vshrl.u32 %v198, 7
    %v200 = vsub.s32 %v197, %v199
    %v201 = vrot.slane %v150, %v200
    %v202 = vlaneseq
    %v203 = vshrl.u32 %v202, 7
    %v204 = vsub.s32 %v197, %v203
    %v205 = vrot.slane %v153, %v204
    %v206 = vlaneseq
    %v207 = vshrl.u32 %v206, 7
    %v208 = vsub.s32 %v197, %v207
    %v209 = vrot.slane %v156, %v208
    %v210 = vlaneseq
    %v211 = vshrl.u32 %v210, 7
    %v212 = vsub.s32 %v197, %v211
    %v213 = vrot.slane %v159, %v212
    %v214 = vlaneseq
    %v215 = vshrl.u32 %v214, 7
    %v216 = vsub.s32 %v197, %v215
    %v217 = vrot.slane %v162, %v216
    %v218 = vlaneseq
    %v219 = vshrl.u32 %v218, 7
    %v220 = vsub.s32 %v197, %v219
    %v221 = vrot.slane %v165, %v220
    %v222 = vlaneseq
    %v223 = vshrl.u32 %v222, 7
    %v224 = vsub.s32 %v197, %v223
    %v225 = vrot.slane %v168, %v224
    %v226 = vlaneseq
    %v227 = vshrl.u32 %v226, 7
    %v228 = vsub.s32 %v197, %v227
    %v229 = vrot.slane %v171, %v228
    %v230 = vlaneseq
    %v231 = vshrl.u32 %v230, 7
    %v232 = vsub.s32 %v197, %v231
    %v233 = vrot.slane %v174, %v232
    %v234 = vlaneseq
    %v235 = vshrl.u32 %v234, 7
    %v236 = vsub.s32 %v197, %v235
    %v237 = vrot.slane %v177, %v236
    %v238 = vlaneseq
    %v239 = vshrl.u32 %v238, 7
    %v240 = vsub.s32 %v197, %v239
    %v241 = vrot.slane %v180, %v240
    %v242 = vlaneseq
    %v243 = vshrl.u32 %v242, 7
    %v244 = vsub.s32 %v197, %v243
    %v245 = vrot.slane %v183, %v244
    %v246 = vlaneseq
    %v247 = vshrl.u32 %v246, 7
    %v248 = vsub.s32 %v197, %v247
    %v249 = vrot.slane %v186, %v248
    %v250 = vlaneseq
    %v251 = vshrl.u32 %v250, 7
    %v252 = vsub.s32 %v197, %v251
    %v253 = vrot.slane %v189, %v252
    %v254 = vlaneseq
    %v255 = vshrl.u32 %v254, 7
    %v256 = vsub.s32 %v197, %v255
    %v257 = vrot.slane %v192, %v256
    %v258 = vlaneseq
    %v259 = vshrl.u32 %v258, 7
    %v260 = vsub.s32 %v197, %v259
    %v261 = vrot.slane %v195, %v260
    %vm262 = vcmask 1041409
    %v263 = vsel %vm262, %v205, %v201
    %vm264 = vcmask 1042434
    %v265 = vsel %vm264, %v209, %v263
    %vm266 = vcmask 1043459
    %v267 = vsel %vm266, %v213, %v265
    %vm268 = vcmask 1044484
    %v269 = vsel %vm268, %v217, %v267
    %vm270 = vcmask 1045509
    %v271 = vsel %vm270, %v221, %v269
    %vm272 = vcmask 1046534
    %v273 = vsel %vm272, %v225, %v271
    %vm274 = vcmask 1047559
    %v275 = vsel %vm274, %v229, %v273
    %v276 = vsel %vm262, %v237, %v233
    %v277 = vsel %vm264, %v241, %v276
    %v278 = vsel %vm266, %v245, %v277
    %v279 = vsel %vm268, %v249, %v278
    %v280 = vsel %vm270, %v253, %v279
    %v281 = vsel %vm272, %v257, %v280
    %v282 = vsel %vm274, %v261, %v281
    %vm285 = vcmask 64512
    %v286 = vsel %vm285, %v275, 0.0
    %287 = vadd.xlane.f32.xlu0 %v286
    %v288 = vpop.xlane.xlu0 %287
    %v289 = vsel %vm285, %v282, 0.0
    %290 = vadd.xlane.f32.xlu0 %v289
    %v291 = vpop.xlane.xlu0 %290
    %v292 = vsub.f32 0.0, %v288
    %v293 = vsub.f32 0.0, %v291
    %v294 = vmul.f32 %v292, 1.442695
    %v295 = vpow.pop %v294
    %v296 = vmul.f32 %v293, 1.442695
    %v297 = vpow.pop %v296
    %v298 = vadd.f32 %v295, 1.0
    %v299 = vadd.f32 %v297, 1.0
    %v300 = vrcp.pop %v298
    %v301 = vmul.f32 1.0, %v300
    %v302 = vrcp.pop %v299
    %v303 = vmul.f32 1.0, %v302
    %v304 = vmul.f32 %v38, %v301
    %v305 = vmul.f32 %v39, %v301
    %v306 = vmul.f32 %v40, %v303
    %v307 = vmul.f32 %v41, %v303
    %308 = vst [vmem:[#allocation7] sm:$0xff] %v304
    %309 = vst [vmem:[#allocation7 + $0x8] sm:$0xff] %v305
    %310 = vst [vmem:[#allocation7 + $0x10] sm:$0xff] %v306
    %311 = vst [vmem:[#allocation7 + $0x18] sm:$0xff] %v307
    // Predicated region
    $region18: #{tpu_custom_call.1} parent=1 // pred_check
      _
    $region19: #{tpu_custom_call.1} parent=1 // pred_check_branch
      %313 = sbr.rel (0) target = $region21
    $region20: #{tpu_custom_call.1} parent=1 // pred_region
      %s315 = ssub.s32 512, 512
      %316 = vsyncadd [#allocation4], %s315
      %s317 = sshll.u32 [#allocation7], 4
      %s318 = int_to_ptr.vmem [resolvable:$true] %s317
      %323 = dma.vmem_to_hbm [thread:$0]  %s318, 512, %s2, [#allocation4], 256, 256, 16
    $region21: #{tpu_custom_call.1} parent=1 // pred_fallthru
      _
    // Predicated region
    $region22: #{tpu_custom_call.1} parent=1 // pred_check
      _
    $region23: #{tpu_custom_call.1} parent=1 // pred_check_branch
      %325 = sbr.rel (0) target = $region25
    $region24: #{tpu_custom_call.1} parent=1 // pred_region
      %326 = dma.done [#allocation4], 512
    $region25: #{tpu_custom_call.1} parent=1 // pred_fallthru
      _
    %327 = vsyncpa [#allocation3], 1
    %328 = vsyncpa [#allocation6], 1
    %329 = vsyncpa [#allocation4], 1

</llo_original>
